<compile_context>
chip_gen: v7x
topology: tpu7x:2x2x1
jax: 0.10.0
libtpu: 0.0.40
codegen_flags: <defaults>
</compile_context>

<pallas_src>
import functools
import numpy as np
import jax
import jax.numpy as jnp
from jax import lax
from jax.experimental import pallas as pl
from jax.experimental.pallas import tpu as pltpu

EPS = 1e-5


def _round_up(x, m):
    return (x + m - 1) // m * m


# -----------------------------------------------------------------------------
# Pallas kernel: one (TM, K) x (K, E_pad) tile of the folded conv + BN matmul.
# Weight and bias blocks are grid-invariant (constant index_map) -> resident.
# -----------------------------------------------------------------------------
def patch_embed_kernel(p_ref, w_ref, b_ref, o_ref):
    acc = jnp.dot(p_ref[...], w_ref[...], preferred_element_type=jnp.float32)
    o_ref[...] = (acc + b_ref[...]).astype(o_ref.dtype)


# -----------------------------------------------------------------------------
# im2col (wrapper-side layout plumbing; supports overlap + padding). Runs on
# a bf16 input to halve the bytes of the pad/gather/transpose materialization.
# -----------------------------------------------------------------------------
def _extract_patches(x, patch, stride, padding):
    # x: (B, T, H, W, Cin) -> (N, K), K = patch*patch*Cin
    # feature order = (dy, dx, cin); patch order = (b, t, ho, wo).
    B, T, H, W, Cin = x.shape
    if padding:
        x = jnp.pad(x, ((0, 0), (0, 0), (padding, padding),
                        (padding, padding), (0, 0)))
    Hp, Wp = H + 2 * padding, W + 2 * padding
    Ho = (Hp - patch) // stride + 1
    Wo = (Wp - patch) // stride + 1
    ridx = stride * np.arange(Ho)[:, None] + np.arange(patch)[None, :]   # (Ho, P)
    cidx = stride * np.arange(Wo)[:, None] + np.arange(patch)[None, :]   # (Wo, P)
    g = x[:, :, ridx[:, :, None, None], cidx[None, None, :, :], :]       # (B,T,Ho,P,Wo,P,C)
    g = jnp.transpose(g, (0, 1, 2, 4, 3, 5, 6))                          # (B,T,Ho,Wo,P,P,C)
    return g.reshape(B * T * Ho * Wo, patch * patch * Cin), (Ho, Wo)


def _choose_tiling(N):
    """Pick (TM, N_pad).

    Prefer a TM that divides N exactly (no padding, no post-kernel slice
    copy), is a multiple of 16 (bf16 sublane packing), is large enough to
    amortize per-grid-step overhead, and leaves >= 2 tiles so both v7x
    TensorCores get work. Fall back to padding N up to a fixed large tile.
    """
    best = 0
    upper = min(1024, N // 2)
    for tm in range(16, upper + 1, 16):
        if N % tm == 0:
            best = tm
    if best >= 256 or (best > 0 and N <= 2048):
        return best, N
    tm = 512 if N >= 512 else _round_up(N, 8)
    return tm, _round_up(N, tm)


# -----------------------------------------------------------------------------
# pallas_call wrapper
# -----------------------------------------------------------------------------
@functools.partial(jax.jit,
                   static_argnames=("patch", "stride", "padding", "out_dtype"))
def patch_embed_overlap(x, w_f, b_f, *, patch, stride, padding,
                        out_dtype=jnp.bfloat16):
    B, T, H, W, Cin = x.shape
    E = w_f.shape[1]

    # Cast to bf16 *before* any pad / gather / transpose so the whole
    # wrapper-side im2col materialization runs at half the bytes.
    x = x.astype(jnp.bfloat16)

    if stride == patch and padding == 0 and H % patch == 0 and W % patch == 0:
        # Non-overlapping fast path: no gather, just reshape + transpose.
        Ho, Wo = H // patch, W // patch
        g = x.reshape(B, T, Ho, patch, Wo, patch, Cin)
        g = jnp.transpose(g, (0, 1, 2, 4, 3, 5, 6))
        patches = g.reshape(B * T * Ho * Wo, patch * patch * Cin)
    else:
        patches, (Ho, Wo) = _extract_patches(x, patch, stride, padding)

    N, K = patches.shape

    # Tiling: 1-D grid over N tiles; the full (K, E_pad) weight stays resident.
    TM, N_pad = _choose_tiling(N)
    E_pad = _round_up(E, 128)

    if N_pad != N:
        patches = jnp.pad(patches, ((0, N_pad - N), (0, 0)))
    if E_pad != E:
        w_f = jnp.pad(w_f, ((0, 0), (0, E_pad - E)))
        b_f = jnp.pad(b_f, ((0, 0), (0, E_pad - E)))

    out_itemsize = jnp.dtype(out_dtype).itemsize
    # VMEM footprint: double-buffered LHS/out tiles + resident weight/bias
    # (counted double-buffered for safety) + slack; capped at v7x's 64 MiB.
    footprint = 2 * (TM * K * 2 + K * E_pad * 2 + E_pad * 4
                     + TM * E_pad * out_itemsize)
    vmem_limit = int(min(64 * 1024 * 1024,
                         max(16 * 1024 * 1024, 2 * footprint)))

    cost = pl.CostEstimate(
        flops=2 * N_pad * K * E_pad,
        transcendentals=0,
        bytes_accessed=N_pad * K * 2 + K * E_pad * 2 + E_pad * 4
                       + N_pad * E_pad * out_itemsize,
    )

    grid = (N_pad // TM,)
    out = pl.pallas_call(
        patch_embed_kernel,
        out_shape=jax.ShapeDtypeStruct((N_pad, E_pad), out_dtype),
        grid=grid,
        in_specs=[
            pl.BlockSpec((TM, K), lambda i: (i, 0)),       # patch rows (bf16)
            pl.BlockSpec((K, E_pad), lambda i: (0, 0)),    # resident folded weight
            pl.BlockSpec((1, E_pad), lambda i: (0, 0)),    # resident folded bias
        ],
        out_specs=pl.BlockSpec((TM, E_pad), lambda i: (i, 0)),
        compiler_params=pltpu.CompilerParams(
            dimension_semantics=("parallel",),
            vmem_limit_bytes=vmem_limit,
        ),
        cost_estimate=cost,
    )(patches, w_f, b_f)

    if N_pad != N or E_pad != E:
        out = out[:N, :E]
    return out.reshape(B, T, Ho, Wo, E)


# -----------------------------------------------------------------------------
# Parameter construction (PyTorch-shaped raw params) + BN/bias folding.
# -----------------------------------------------------------------------------
def init_params(key, patch, embed_dim, in_chans=3):
    ks = jax.random.split(key, 6)
    fan_in = in_chans * patch * patch
    return {
        "proj_W": (jax.random.normal(ks[0], (embed_dim, in_chans, 1, patch, patch))
                   / np.sqrt(fan_in)).astype(jnp.float32),   # Conv3d weight (E,Cin,1,P,P)
        "proj_b": (0.05 * jax.random.normal(ks[1], (embed_dim,))).astype(jnp.float32),
        "bn_g": (1.0 + 0.1 * jax.random.normal(ks[2], (embed_dim,))).astype(jnp.float32),
        "bn_b": (0.1 * jax.random.normal(ks[3], (embed_dim,))).astype(jnp.float32),
        "bn_m": (0.1 * jax.random.normal(ks[4], (embed_dim,))).astype(jnp.float32),
        "bn_v": (0.5 + jax.random.uniform(ks[5], (embed_dim,))).astype(jnp.float32),
    }


def prepare_kernel_params(p, patch, embed_dim):
    # Fold inference-mode BatchNorm + conv bias into a single (K,E) weight and
    # (1,E) bias; weight stored bf16 for the MXU, bias kept f32.
    w = p["proj_W"][:, :, 0]                                       # (E, Cin, P, P)
    cin = w.shape[1]
    wmat = jnp.transpose(w, (2, 3, 1, 0)).reshape(patch * patch * cin, embed_dim)  # (K, E)
    scale = p["bn_g"] / jnp.sqrt(p["bn_v"] + EPS)
    shift = p["bn_b"] - p["bn_m"] * scale
    w_f = (wmat * scale[None, :]).astype(jnp.bfloat16)
    b_f = (p["proj_b"] * scale + shift)[None, :].astype(jnp.float32)
    return w_f, b_f


# -----------------------------------------------------------------------------
# Pure-JAX reference (independent conv lowering), channels-last, f32.
# -----------------------------------------------------------------------------
def reference(x, p, patch, stride, padding):
    B, T, H, W, Cin = x.shape
    E = p["proj_W"].shape[0]
    w2d = jnp.transpose(p["proj_W"][:, :, 0], (2, 3, 1, 0))        # (P, P, Cin, E)
    x2 = x.reshape(B * T, H, W, Cin)
    y = lax.conv_general_dilated(
        x2, w2d, window_strides=(stride, stride),
        padding=[(padding, padding), (padding, padding)],
        dimension_numbers=("NHWC", "HWIO", "NHWC"),
        precision=lax.Precision.HIGHEST)
    y = y + p["proj_b"]
    scale = p["bn_g"] / jnp.sqrt(p["bn_v"] + EPS)
    y = (y - p["bn_m"]) * scale + p["bn_b"]
    Ho, Wo = y.shape[1], y.shape[2]
    return y.reshape(B, T, Ho, Wo, E)


if __name__ == "__main__":
    key = jax.random.PRNGKey(0)
    configs = [
        # default-style non-overlapping patch embed (fast path, no padding)
        dict(B=2, T=4, H=32, W=32, patch=8, stride=8, padding=0, embed_dim=128),
        # overlapping variant (stride < patch, nonzero spatial padding)
        dict(B=2, T=4, H=32, W=32, patch=8, stride=4, padding=2, embed_dim=128),
        # awkward shapes: exercises N/E padding + post-kernel slice fallback
        dict(B=1, T=2, H=24, W=24, patch=8, stride=8, padding=0, embed_dim=96),
    ]
    for i, cfg in enumerate(configs):
        kx, kp, key = jax.random.split(key, 3)
        x = jax.random.normal(
            kx, (cfg["B"], cfg["T"], cfg["H"], cfg["W"], 3), dtype=jnp.float32)
        p = init_params(kp, cfg["patch"], cfg["embed_dim"])
        w_f, b_f = prepare_kernel_params(p, cfg["patch"], cfg["embed_dim"])

        out = patch_embed_overlap(x, w_f, b_f, patch=cfg["patch"],
                                  stride=cfg["stride"], padding=cfg["padding"],
                                  out_dtype=jnp.bfloat16)
        out = jax.block_until_ready(out)

        ref = jax.block_until_ready(
            reference(x, p, cfg["patch"], cfg["stride"], cfg["padding"]))
        assert out.shape == ref.shape, (out.shape, ref.shape)
        # tolerance accounts for bf16 MXU operands + bf16 output vs f32 reference
        o = np.asarray(out, dtype=np.float32)
        r = np.asarray(ref, dtype=np.float32)
        if not np.allclose(o, r, atol=7.5e-2, rtol=5e-2):
            err = np.max(np.abs(o - r))
            raise AssertionError(f"config {i}: kernel/reference mismatch, max abs err={err}")
    print("KERNEL_OK")
</pallas_src>

<mosaic_0001>
module attributes {stable_mosaic.version = 11 : i64} {
  func.func @patch_embed_kernel(%arg0: i32, %arg1: memref<64x192xbf16, #tpu.memory_space<vmem>>, %arg2: memref<192x128xbf16, #tpu.memory_space<vmem>>, %arg3: memref<1x128xf32, #tpu.memory_space<vmem>>, %arg4: memref<64x128xbf16, #tpu.memory_space<vmem>>) attributes {dimension_semantics = [#tpu.dimension_semantics<parallel>], iteration_bounds = array<i64: 2>, scalar_prefetch = 0 : i64, scratch_operands = 0 : i64, tpu.core_type = #tpu.core_type<tc>, window_params = [{transform_indices = @transform_0, window_bounds = array<i64: 64, 192>}, {pipeline_mode = #tpu.pipeline_mode<synchronous>, transform_indices = @transform_1, window_bounds = array<i64: 192, 128>}, {pipeline_mode = #tpu.pipeline_mode<synchronous>, transform_indices = @transform_2, window_bounds = array<i64: 1, 128>}, {transform_indices = @transform_3, window_bounds = array<i64: 64, 128>}]} {
    %c0 = arith.constant 0 : index
    %c0_0 = arith.constant 0 : index
    %0 = vector.load %arg1[%c0, %c0_0] : memref<64x192xbf16, #tpu.memory_space<vmem>>, vector<64x192xbf16>
    %c0_1 = arith.constant 0 : index
    %c0_2 = arith.constant 0 : index
    %1 = vector.load %arg2[%c0_1, %c0_2] : memref<192x128xbf16, #tpu.memory_space<vmem>>, vector<192x128xbf16>
    %cst = arith.constant dense<0.000000e+00> : vector<64x128xf32>
    %2 = tpu.matmul %0, %1, %cst {dimension_numbers = #tpu.dot_dimension_numbers<[1], [0], [0], [1], [0, 0, 1, 1], [], []>} : vector<64x192xbf16>, vector<192x128xbf16>, vector<64x128xf32> -> vector<64x128xf32>
    %c0_3 = arith.constant 0 : index
    %c0_4 = arith.constant 0 : index
    %3 = vector.load %arg3[%c0_3, %c0_4] : memref<1x128xf32, #tpu.memory_space<vmem>>, vector<1x128xf32>
    %4 = vector.broadcast %3 : vector<1x128xf32> to vector<64x128xf32>
    %5 = arith.addf %2, %4 : vector<64x128xf32>
    %6 = arith.truncf %5 : vector<64x128xf32> to vector<64x128xbf16>
    %c0_5 = arith.constant 0 : index
    %c0_6 = arith.constant 0 : index
    %7 = vector.load %arg4[%c0_5, %c0_6] : memref<64x128xbf16, #tpu.memory_space<vmem>>, vector<64x128xbf16>
    tpu.vector_store %arg4[%c0_5, %c0_6], %6 {strides = array<i32>} : memref<64x128xbf16, #tpu.memory_space<vmem>>, vector<64x128xbf16>,
    return
  }
  func.func @transform_0(%arg0: i32) -> (i32, i32) {
    %c0_i32 = arith.constant 0 : i32
    %c0_i32_0 = arith.constant 0 : i32
    return %arg0, %c0_i32 : i32, i32
  }
  func.func @transform_1(%arg0: i32) -> (i32, i32) {
    %c0_i32 = arith.constant 0 : i32
    %c0_i32_0 = arith.constant 0 : i32
    %c0_i32_1 = arith.constant 0 : i32
    return %c0_i32, %c0_i32_0 : i32, i32
  }
  func.func @transform_2(%arg0: i32) -> (i32, i32) {
    %c0_i32 = arith.constant 0 : i32
    %c0_i32_0 = arith.constant 0 : i32
    %c0_i32_1 = arith.constant 0 : i32
    return %c0_i32, %c0_i32_0 : i32, i32
  }
  func.func @transform_3(%arg0: i32) -> (i32, i32) {
    %c0_i32 = arith.constant 0 : i32
    %c0_i32_0 = arith.constant 0 : i32
    return %arg0, %c0_i32 : i32, i32
  }
}

</mosaic_0001>

<llo_original>
// kernel: patch_embed_overlap.1
$region0: #{patch_embed_overlap.1}
  #allocation0 [shape = 'u32[]', space=smem, size = 0x4, offset = 0x4, fixed_abs, tag = 'smem constant byte address 0x4 - core index']
  #allocation1 [shape = 'u32[144,128]{1,0:T(1,128)}', space=vmem, size = 0x12000, scoped, tag = 'internal scratch']
  %s0 = inlined_call_operand.vmem [shape: bf16[128,192], index: 0, kind: input, shape index: {}]
  %s1 = inlined_call_operand.vmem [shape: bf16[192,128], index: 1, kind: input, shape index: {}]
  %s2 = inlined_call_operand.vmem [shape: f32[1,128], index: 2, kind: input, shape index: {}]
  %s3 = inlined_call_operand.hbm [shape: bf16[128,128], index: 3, kind: output, shape index: {}]
  %s4 = sld [smem:[#allocation0]]
  $region45: #{patch_embed_overlap.1} parent=0
    _
  %s6 = ssub.s32 1, %s4
  %s7 = scalar_select 0, %s6, %s4
  $region1: #{patch_embed_overlap.1} parent=0
    #allocation2 [shape = 'u8[32768]{0}', space=vmem, size = 0x8000, scoped, tag = 'output window, operand 0']
    #allocation3 [shape = 's32[2]{0}', space=sflag, size = 0x8, scoped, tag = 'scoped memory for patch_embed_overlap.1']
    %8 = vsyncpa [#allocation3], 0
    %s9 = scalar_lea.sflag [#allocation3], 1
    %10 = vsyncpa %s9, 0
    loop: start=0, step=1, limit=4
    $region2: #{patch_embed_overlap.1} parent=1 // loop_pre_header
      _
    $region3: #{patch_embed_overlap.1} parent=1 // loop_header
      %s12 = sphi 0, %s16
      %p13 = scmp.ge.s32.totalorder %s12, 4
      %s22 = sphi 0, %s24
      %s25 = sphi 0, %s22
      %s26 = sphi 0, %s25
      %s42 = sphi 0, %s26
      %s46 = sphi 0, %s46
      %s48 = sphi 0, %s46
      %s49 = sphi 0, %s48
      %s63 = sphi 0, %s49
      %s67 = sphi 0, %s67
      %s69 = sphi 0, %s67
      %s70 = sphi 0, %s69
      %s84 = sphi 0, %s70
      %s90 = sphi 0, %s92
      %s93 = sphi 0, %s90
      %s94 = sphi 0, %s93
      %s110 = sphi 0, %s94
    $region4: #{patch_embed_overlap.1} parent=1 // loop_header_branch
      %15 = sbr.rel (%p13) target = $region8
    $region5: #{patch_embed_overlap.1} parent=1 // loop_body
      %s17 = ssub.s32 %s12, 1
      %s18 = ssub.s32 %s12, 2
      %s19 = sadd.s32 %s12, 1
      %s20 = ssub.s32 %s12, %s19
      %p21 = scmp.eq.s32.totalorder %s20, 0
      %s23 = sadd.s32 %s22, 1
      %s24 = scalar_select %p21, %s22, %s23
      %p27 = pneg %p21
      %p28 = scmp.eq.s32.totalorder %s12, 1
      %p29 = por %p27, %p28
      %p30 = scmp.ne.s32.totalorder %s22, %s25
      %p31 = scmp.eq.s32.totalorder %s12, 0
      %p32 = por %p30, %p31
      %p33 = scmp.ne.s32.totalorder %s22, %s25
      %p34 = scmp.eq.s32.totalorder %s17, 1
      %p35 = por %p33, %p34
      %p36 = scmp.ne.s32.totalorder %s25, %s26
      %p37 = scmp.eq.s32.totalorder %s17, 0
      %p38 = por %p36, %p37
      %p39 = scmp.ne.s32.totalorder %s25, %s26
      %p40 = scmp.eq.s32.totalorder %s18, 1
      %p41 = por %p39, %p40
      %p43 = scmp.ne.s32.totalorder %s26, %s42
      %p44 = scmp.eq.s32.totalorder %s18, 0
      %p45 = por %p43, %p44
      %s47 = sadd.s32 %s46, 1
      %p50 = scmp.eq.s32.totalorder %s12, 1
      %p51 = scmp.ne.s32.totalorder %s46, %s48
      %p52 = scmp.eq.s32.totalorder %s12, 0
      %p53 = por %p51, %p52
      %p54 = scmp.ne.s32.totalorder %s46, %s48
      %p55 = scmp.eq.s32.totalorder %s17, 1
      %p56 = por %p54, %p55
      %p57 = scmp.ne.s32.totalorder %s48, %s49
      %p58 = scmp.eq.s32.totalorder %s17, 0
      %p59 = por %p57, %p58
      %p60 = scmp.ne.s32.totalorder %s48, %s49
      %p61 = scmp.eq.s32.totalorder %s18, 1
      %p62 = por %p60, %p61
      %p64 = scmp.ne.s32.totalorder %s49, %s63
      %p65 = scmp.eq.s32.totalorder %s18, 0
      %p66 = por %p64, %p65
      %s68 = sadd.s32 %s67, 1
      %p71 = scmp.eq.s32.totalorder %s12, 1
      %p72 = scmp.ne.s32.totalorder %s67, %s69
      %p73 = scmp.eq.s32.totalorder %s12, 0
      %p74 = por %p72, %p73
      %p75 = scmp.ne.s32.totalorder %s67, %s69
      %p76 = scmp.eq.s32.totalorder %s17, 1
      %p77 = por %p75, %p76
      %p78 = scmp.ne.s32.totalorder %s69, %s70
      %p79 = scmp.eq.s32.totalorder %s17, 0
      %p80 = por %p78, %p79
      %p81 = scmp.ne.s32.totalorder %s69, %s70
      %p82 = scmp.eq.s32.totalorder %s18, 1
      %p83 = por %p81, %p82
      %p85 = scmp.ne.s32.totalorder %s70, %s84
      %p86 = scmp.eq.s32.totalorder %s18, 0
      %p87 = por %p85, %p86
      %s88 = ssub.s32 %s12, %s19
      %p89 = scmp.eq.s32.totalorder %s88, 0
      %s91 = sadd.s32 %s90, 1
      %s92 = scalar_select %p89, %s90, %s91
      %p95 = pneg %p89
      %p96 = scmp.eq.s32.totalorder %s12, 1
      %p97 = por %p95, %p96
      %p98 = scmp.ne.s32.totalorder %s90, %s93
      %p99 = scmp.eq.s32.totalorder %s12, 0
      %p100 = por %p98, %p99
      %p101 = scmp.ne.s32.totalorder %s90, %s93
      %p102 = scmp.eq.s32.totalorder %s17, 1
      %p103 = por %p101, %p102
      %p104 = scmp.ne.s32.totalorder %s93, %s94
      %p105 = scmp.eq.s32.totalorder %s17, 0
      %p106 = por %p104, %p105
      %p107 = scmp.ne.s32.totalorder %s93, %s94
      %p108 = scmp.eq.s32.totalorder %s18, 1
      %p109 = por %p107, %p108
      %p111 = scmp.ne.s32.totalorder %s94, %s110
      %p112 = scmp.eq.s32.totalorder %s18, 0
      %p113 = por %p111, %p112
      %p114 = scmp.le.s32.totalorder 1, %s12
      %p115 = scmp.lt.s32.totalorder %s12, 3
      %p116 = pnand %p114, %p115
      %p117 = pneg %p116
      // Predicated region
      $region9: #{patch_embed_overlap.1} parent=5 // pred_check
        _
      $region10: #{patch_embed_overlap.1} parent=5 // pred_check_branch
        %119 = sbr.rel (%p116) target = $region12
      $region11: #{patch_embed_overlap.1} parent=5 // pred_region
        %s120 = ssub.s32 %s12, 1
        // Predicated region
        $region13: #{patch_embed_overlap.1} parent=11 // pred_check
          %p121 = pneg %p59
        $region14: #{patch_embed_overlap.1} parent=11 // pred_check_branch
          %123 = sbr.rel (%p121) target = $region16
        $region15: #{patch_embed_overlap.1} parent=11 // pred_region
          _
        $region16: #{patch_embed_overlap.1} parent=11 // pred_fallthru
          _
        // Predicated region
        $region17: #{patch_embed_overlap.1} parent=11 // pred_check
          %p124 = pneg %p80
        $region18: #{patch_embed_overlap.1} parent=11 // pred_check_branch
          %126 = sbr.rel (%p124) target = $region20
        $region19: #{patch_embed_overlap.1} parent=11 // pred_region
          _
        $region20: #{patch_embed_overlap.1} parent=11 // pred_fallthru
          _
      $region12: #{patch_embed_overlap.1} parent=5 // pred_fallthru
        _
      %p127 = scmp.lt.s32.totalorder %s12, 2
      // Predicated region
      $region21: #{patch_embed_overlap.1} parent=5 // pred_check
        %p128 = pneg %p127
      $region22: #{patch_embed_overlap.1} parent=5 // pred_check_branch
        %130 = sbr.rel (%p128) target = $region24
      $region23: #{patch_embed_overlap.1} parent=5 // pred_region
        // Predicated region
        $region25: #{patch_embed_overlap.1} parent=23 // pred_check
          %p131 = pneg %p32
        $region26: #{patch_embed_overlap.1} parent=23 // pred_check_branch
          %133 = sbr.rel (%p131) target = $region28
        $region27: #{patch_embed_overlap.1} parent=23 // pred_region
          %s134 = smul.u32 8, %s12
          %p135 = scmp.lt.s32.totalorder %s134, 15
          %s136 = scalar_select %p135, %s134, 15
          %s137 = smul.addr %s136, 2
          %s138 = smul.addr %s137, 4
          %s139 = scalar_lea.vmem %s0, %s138
          %s140 = smul.u32 8, %s12
        $region28: #{patch_embed_overlap.1} parent=23 // pred_fallthru
          _
      $region24: #{patch_embed_overlap.1} parent=5 // pred_fallthru
        _
      %p141 = scmp.le.s32.totalorder 1, %s12
      %p142 = scmp.lt.s32.totalorder %s12, 3
      %p143 = pnand %p141, %p142
      %p144 = pneg %p143
      // Predicated region
      $region29: #{patch_embed_overlap.1} parent=5 // pred_check
        _
      $region30: #{patch_embed_overlap.1} parent=5 // pred_check_branch
        %146 = sbr.rel (%p143) target = $region32
      $region31: #{patch_embed_overlap.1} parent=5 // pred_region
        %s147 = ssub.s32 %s12, 1
        %s148 = smul.u32 8, %s17
        %p149 = scmp.lt.s32.totalorder %s148, 15
        %s150 = scalar_select %p149, %s148, 15
        %s151 = smul.addr %s150, 2
        %s152 = smul.addr %s151, 4
        %s153 = scalar_lea.vmem %s0, %s152
        %p154 = pneg %p38
        %p155 = pneg %p35
        %p156 = pneg %p59
        %p157 = pneg %p56
        %p158 = pneg %p80
        %p159 = pneg %p77
        %p160 = pneg %p106
        %p161 = pneg %p103
        %s162 = sand.u32 %s93, 1
        %s163 = scalar_lea.sflag [#allocation3], %s162
        %s164 = sand.u32 %s93, 1
        %s165 = smul.addr %s164, 32
        %s166 = scalar_lea.vmem [#allocation2], %s165
        %s167 = smul.u32 8, %s17
        %p168 = scmp.lt.s32.totalorder %s167, 15
        %s169 = scalar_select %p168, %s167, 15
        %s170 = smul.addr %s169, 2
        %s171 = smul.addr %s170, 4
        %s172 = scalar_lea.vmem %s0, %s171
        %s173 = smul.u32 8, %s17
        %s174 = smul.u32 8, %s17
        %v176 = vld [vmem:[%s172] sm:$0xff]
        %v177 = vld [vmem:[%s172 + $0x8] sm:$0xff]
        %v178 = vld [vmem:[%s172 + $0x10] sm:$0xff]
        %v179 = vld [vmem:[%s172 + $0x18] sm:$0xff]
        %v180 = vld [vmem:[%s172 + $0x20] sm:$0xff]
        %v181 = vld [vmem:[%s172 + $0x28] sm:$0xff]
        %v182 = vld [vmem:[%s172 + $0x30] sm:$0xff]
        %v183 = vld [vmem:[%s172 + $0x38] sm:$0xff]
        %v184 = vld [vmem:[%s1] sm:$0xf]
        %v185 = vld [vmem:[%s1 + $0x4] sm:$0xf]
        %v186 = vld [vmem:[%s1 + $0x8] sm:$0xf]
        %v187 = vld [vmem:[%s1 + $0xc] sm:$0xf]
        %v188 = vld [vmem:[%s1 + $0x10] sm:$0xf]
        %v189 = vld [vmem:[%s1 + $0x14] sm:$0xf]
        %v190 = vld [vmem:[%s1 + $0x18] sm:$0xf]
        %v191 = vld [vmem:[%s1 + $0x1c] sm:$0xf]
        %v192 = vld [vmem:[%s1 + $0x20] sm:$0xf]
        %v193 = vld [vmem:[%s1 + $0x24] sm:$0xf]
        %v194 = vld [vmem:[%s1 + $0x28] sm:$0xf]
        %v195 = vld [vmem:[%s1 + $0x2c] sm:$0xf]
        %v196 = vld [vmem:[%s1 + $0x30] sm:$0xf]
        %v197 = vld [vmem:[%s1 + $0x34] sm:$0xf]
        %v198 = vld [vmem:[%s1 + $0x38] sm:$0xf]
        %v199 = vld [vmem:[%s1 + $0x3c] sm:$0xf]
        %v200 = vld [vmem:[%s1 + $0x40] sm:$0xf]
        %v201 = vld [vmem:[%s1 + $0x44] sm:$0xf]
        %v202 = vld [vmem:[%s1 + $0x48] sm:$0xf]
        %v203 = vld [vmem:[%s1 + $0x4c] sm:$0xf]
        %v204 = vld [vmem:[%s1 + $0x50] sm:$0xf]
        %v205 = vld [vmem:[%s1 + $0x54] sm:$0xf]
        %v206 = vld [vmem:[%s1 + $0x58] sm:$0xf]
        %v207 = vld [vmem:[%s1 + $0x5c] sm:$0xf]
        %v208 = vld [vmem:[%s2] sm:$0x1]
        %v210 = vlaneseq
        %v211 = vshrl.u32 %v210, 7
        %v212 = vsub.s32 0, %v211
        %v213 = vrot.slane %v208, %v212
        %v223 = vunpack.c.l.b16 %v176
        %v224 = vunpack.c.h.b16 %v176
        %v225 = vunpack.c.l.b16 %v177
        %v226 = vunpack.c.h.b16 %v177
        %v227 = vunpack.c.l.b16 %v178
        %v228 = vunpack.c.h.b16 %v178
        %v229 = vunpack.c.l.b16 %v179
        %v230 = vunpack.c.h.b16 %v179
        %v231 = vunpack.c.l.b16 %v180
        %v232 = vunpack.c.h.b16 %v180
        %v233 = vunpack.c.l.b16 %v181
        %v234 = vunpack.c.h.b16 %v181
        %v235 = vunpack.c.l.b16 %v182
        %v236 = vunpack.c.h.b16 %v182
        %v237 = vunpack.c.l.b16 %v183
        %v238 = vunpack.c.h.b16 %v183
        %v239 = vpack.c.b16 %v225, %v223
        %v240 = vpack.c.b16 %v226, %v224
        %v241 = vpack.c.b16 %v229, %v227
        %v242 = vpack.c.b16 %v230, %v228
        %v243 = vpack.c.b16 %v233, %v231
        %v244 = vpack.c.b16 %v234, %v232
        %v245 = vpack.c.b16 %v237, %v235
        %v246 = vpack.c.b16 %v238, %v236
        %v275 = vunpack.c.l.b16 %v184
        %v276 = vunpack.c.l.b16 %v185
        %v277 = vunpack.c.l.b16 %v186
        %v278 = vunpack.c.l.b16 %v187
        %v279 = vunpack.c.l.b16 %v188
        %v280 = vunpack.c.l.b16 %v189
        %v281 = vunpack.c.l.b16 %v190
        %v282 = vunpack.c.l.b16 %v191
        %v283 = vunpack.c.l.b16 %v192
        %v284 = vunpack.c.l.b16 %v193
        %v285 = vunpack.c.l.b16 %v194
        %v286 = vunpack.c.l.b16 %v195
        %v287 = vunpack.c.l.b16 %v196
        %v288 = vunpack.c.l.b16 %v197
        %v289 = vunpack.c.l.b16 %v198
        %v290 = vunpack.c.l.b16 %v199
        %v291 = vunpack.c.l.b16 %v200
        %v292 = vunpack.c.l.b16 %v201
        %v293 = vunpack.c.l.b16 %v202
        %v294 = vunpack.c.l.b16 %v203
        %v295 = vunpack.c.l.b16 %v204
        %v296 = vunpack.c.l.b16 %v205
        %v297 = vunpack.c.l.b16 %v206
        %v298 = vunpack.c.l.b16 %v207
        %v299 = vpack.c.b16 %v276, %v275
        %v300 = vpack.c.b16 %v278, %v277
        %v301 = vpack.c.b16 %v280, %v279
        %v302 = vpack.c.b16 %v282, %v281
        %v303 = vpack.c.b16 %v284, %v283
        %v304 = vpack.c.b16 %v286, %v285
        %v305 = vpack.c.b16 %v288, %v287
        %v306 = vpack.c.b16 %v290, %v289
        %v307 = vpack.c.b16 %v292, %v291
        %v308 = vpack.c.b16 %v294, %v293
        %v309 = vpack.c.b16 %v296, %v295
        %v310 = vpack.c.b16 %v298, %v297
        %vm323 = vcmask 523264
        %v325 = vsel %vm323, %v240, 0
        %v328 = vsel %vm323, %v242, 0
        %v331 = vsel %vm323, %v244, 0
        %v334 = vsel %vm323, %v246, 0
        %336 = vmatprep.subr.bf16.mxu0 0
        %337 = vmatpush1.bf16.msra.mxu0 %v299
        %338 = vmatprep.subr.bf16.mxu0 0
        %339 = vmatpush1.bf16.msra.mxu0 %v300
        %340 = vmatprep.subr.bf16.mxu0 0
        %341 = vmatpush1.bf16.msra.mxu0 %v301
        %342 = vmatprep.subr.bf16.mxu0 0
        %343 = vmatpush1.bf16.msra.mxu0 %v302
        %344 = vmatprep.subr.bf16.mxu0 0
        %345 = vmatpush1.bf16.msra.mxu0 %v303
        %346 = vmatprep.subr.bf16.mxu0 0
        %347 = vmatpush1.bf16.msra.mxu0 %v304
        %348 = vmatprep.subr.bf16.mxu0 0
        %349 = vmatpush1.bf16.msra.mxu0 %v305
        %350 = vmatprep.subr.bf16.mxu0 0
        %351 = vmatpush1.bf16.msra.mxu0 %v306
        %352 = vmatprep.subr.bf16.mxu0 0
        %353 = vmatpush1.bf16.msra.mxu0 %v307
        %354 = vmatprep.subr.bf16.mxu0 0
        %355 = vmatpush1.bf16.msra.mxu0 %v308
        %356 = vmatprep.subr.bf16.mxu0 0
        %357 = vmatpush1.bf16.msra.mxu0 %v309
        %358 = vmatprep.subr.bf16.mxu0 0
        %359 = vmatpush1.bf16.msra.mxu0 %v310
        %360 = vmatprep.subr.bf16.mxu0 0
        %361 = vmatpush1.bf16.msra.mxu0 0
        %362 = vmatprep.subr.bf16.mxu0 0
        %363 = vmatpush1.bf16.msra.mxu0 0
        %364 = vmatprep.subr.bf16.mxu0 0
        %365 = vmatpush1.bf16.msra.mxu0 0
        %366 = vmatprep.subr.bf16.mxu0 0
        %367 = vmatpush1.bf16.msra.mxu0 0
        %368 = vmatprep.mubr.bf16.mxu0 %v325
        %369 = vmatmul.mubr.bf16.gmra.mrb[0].mxu0 %v239
        %v370 = vpop.f32.mrb[0].mxu0
        %v371 = vadd.f32 %v213, %v370
        %v372 = vpop.f32.mrb[0].mxu0
        %v373 = vpop.f32.mrb[0].mxu0
        %v374 = vadd.f32 %v213, %v373
        %v375 = vpop.f32.mrb[0].mxu0
        %376 = vmatprep.mubr.bf16.mxu0 %v328
        %377 = vmatmul.mubr.bf16.gmra.mrb[0].mxu0 %v241
        %v378 = vpop.f32.mrb[0].mxu0
        %v379 = vadd.f32 %v213, %v378
        %v380 = vpop.f32.mrb[0].mxu0
        %v381 = vpop.f32.mrb[0].mxu0
        %v382 = vadd.f32 %v213, %v381
        %v383 = vpop.f32.mrb[0].mxu0
        %384 = vmatprep.mubr.bf16.mxu0 %v331
        %385 = vmatmul.mubr.bf16.gmra.mrb[0].mxu0 %v243
        %v386 = vpop.f32.mrb[0].mxu0
        %v387 = vadd.f32 %v213, %v386
        %v388 = vpop.f32.mrb[0].mxu0
        %v389 = vpop.f32.mrb[0].mxu0
        %v390 = vadd.f32 %v213, %v389
        %v391 = vpop.f32.mrb[0].mxu0
        %392 = vmatprep.mubr.bf16.mxu0 %v334
        %393 = vmatmul.mubr.bf16.gmra.mrb[0].mxu0 %v245
        %v394 = vpop.f32.mrb[0].mxu0
        %v395 = vadd.f32 %v213, %v394
        %v396 = vpop.f32.mrb[0].mxu0
        %v397 = vpop.f32.mrb[0].mxu0
        %v398 = vadd.f32 %v213, %v397
        %v399 = vpop.f32.mrb[0].mxu0
        %400 = vdwg.mxu0
        %v401 = vpack.c.bf16 %v374, %v371
        %v402 = vpack.c.bf16 %v382, %v379
        %v403 = vpack.c.bf16 %v390, %v387
        %v404 = vpack.c.bf16 %v398, %v395
        %v409 = vunpack.c.l.b16 %v401
        %v410 = vunpack.c.h.b16 %v401
        %v411 = vunpack.c.l.b16 %v402
        %v412 = vunpack.c.h.b16 %v402
        %v413 = vunpack.c.l.b16 %v403
        %v414 = vunpack.c.h.b16 %v403
        %v415 = vunpack.c.l.b16 %v404
        %v416 = vunpack.c.h.b16 %v404
        %v417 = vpack.c.b16 %v409, %v409
        %v418 = vpack.c.b16 %v410, %v410
        %v419 = vpack.c.b16 %v411, %v411
        %v420 = vpack.c.b16 %v412, %v412
        %v421 = vpack.c.b16 %v413, %v413
        %v422 = vpack.c.b16 %v414, %v414
        %v423 = vpack.c.b16 %v415, %v415
        %v424 = vpack.c.b16 %v416, %v416
        %433 = vst [vmem:[%s166] sm:$0xf] %v417
        %434 = vst [vmem:[%s166 + $0x4] sm:$0xf] %v418
        %435 = vst [vmem:[%s166 + $0x8] sm:$0xf] %v419
        %436 = vst [vmem:[%s166 + $0xc] sm:$0xf] %v420
        %437 = vst [vmem:[%s166 + $0x10] sm:$0xf] %v421
        %438 = vst [vmem:[%s166 + $0x14] sm:$0xf] %v422
        %439 = vst [vmem:[%s166 + $0x18] sm:$0xf] %v423
        %440 = vst [vmem:[%s166 + $0x1c] sm:$0xf] %v424
        %s441 = sand.u32 %s93, 1
        %s442 = scalar_lea.sflag [#allocation3], %s441
        %s443 = sand.u32 %s93, 1
        %s444 = smul.addr %s443, 32
        %s445 = scalar_lea.vmem [#allocation2], %s444
        // Predicated region
        $region33: #{patch_embed_overlap.1} parent=31 // pred_check
          %p446 = pneg %p103
        $region34: #{patch_embed_overlap.1} parent=31 // pred_check_branch
          %448 = sbr.rel (%p446) target = $region36
        $region35: #{patch_embed_overlap.1} parent=31 // pred_region
          %s449 = smul.u32 8, %s17
          %s451 = ssub.s32 512, 512
          %452 = vsyncadd %s442, %s451
          %s453 = smul.addr %s449, 64
          %s454 = scalar_lea.hbm %s3, %s453
          %s455 = sshll.u32 %s445, 4
          %s456 = int_to_ptr.vmem [resolvable:$true] %s455
          %461 = dma.vmem_to_hbm [thread:$0]  %s456, 512, %s454, %s442, 64, 64, 4
        $region36: #{patch_embed_overlap.1} parent=31 // pred_fallthru
          _
      $region32: #{patch_embed_overlap.1} parent=5 // pred_fallthru
        _
      %p462 = scmp.le.s32.totalorder 2, %s12
      // Predicated region
      $region37: #{patch_embed_overlap.1} parent=5 // pred_check
        %p463 = pneg %p462
      $region38: #{patch_embed_overlap.1} parent=5 // pred_check_branch
        %465 = sbr.rel (%p463) target = $region40
      $region39: #{patch_embed_overlap.1} parent=5 // pred_region
        %s466 = ssub.s32 %s12, 2
        // Predicated region
        $region41: #{patch_embed_overlap.1} parent=39 // pred_check
          %p467 = pneg %p109
        $region42: #{patch_embed_overlap.1} parent=39 // pred_check_branch
          %469 = sbr.rel (%p467) target = $region44
        $region43: #{patch_embed_overlap.1} parent=39 // pred_region
          %s470 = sand.u32 %s94, 1
          %s471 = scalar_lea.sflag [#allocation3], %s470
          %s472 = sand.u32 %s94, 1
          %s473 = smul.addr %s472, 32
          %s474 = scalar_lea.vmem [#allocation2], %s473
          %475 = dma.done %s471, 512
        $region44: #{patch_embed_overlap.1} parent=39 // pred_fallthru
          _
      $region40: #{patch_embed_overlap.1} parent=5 // pred_fallthru
        _
    $region6: #{patch_embed_overlap.1} parent=1 // loop_footer
      %s16 = sadd.s32 1, %s12
    $region7: #{patch_embed_overlap.1} parent=1 // loop_footer_branch
      %11 = sbr.rel target = $region3
    $region8: #{patch_embed_overlap.1} parent=1 // loop_exit
      _
    %476 = vsyncpa [#allocation3], 1
    %s477 = scalar_lea.sflag [#allocation3], 1
    %478 = vsyncpa %s477, 1

</llo_original>
